<compile_context>
chip_gen: v6e
topology: v6e:2x2x1
jax: 0.10.0
libtpu: 0.0.40
codegen_flags: <defaults>
</compile_context>

<pallas_src>
import numpy as np
import jax
import jax.numpy as jnp
from jax import lax
from jax.experimental import pallas as pl
from jax.experimental.pallas import tpu as pltpu

# ----- module hyper-params (small, consistent with the torch module) -----
NUM_ABC = 10          # len(env.abc)
E = 32                # char embedding size == cnn input_size
H = 32                # cnn hidden_size (== input_size so stacked Conv1d(input,hidden) is valid)
K = 3                 # cnn kernel_size
H2 = H // 2           # hidden layer size of PolicyNetwork.hidden (16)
B, W, L = 2, 4, 8     # batch (states), words per state, positions per word
L1 = L - K + 1        # length after conv layer 1 (6)
L2 = L1 - K + 1       # length after conv layer 2 (4)
NA = 7 * NUM_ABC      # raw logit width (70)
NA_PAD = 128          # lane-dense padded logit width

# ----- batching / tiling config -----
TB = 8                # states per grid tile (=> 8-row sublane-dense output stores)
NWT = TB * W + W      # words processed per tile: TB states' curr words + shared end words (36)

# ----- packed parameter slab layout (all row offsets multiples of 8) -----
SLAB_LANES = L1 * H               # 192
R_W1 = 0                          # [L*NUM_ABC=80, L1*H=192]  conv1 Toeplitz, embedding folded in
R_W2 = R_W1 + L * NUM_ABC         # 80:  [L1*H=192, L2*H=128]  conv2 Toeplitz
R_WH = R_W2 + L1 * H              # 272: [H=32, H2=16]         hidden Linear
R_WP = R_WH + H                   # 304: [H2=16, NA_PAD=128]   projection Linear (lane-padded)
R_M = R_WP + H2                   # 320: [TB=8, NWT=36]        mean-of-difference matrix
R_B = R_M + TB                    # 328: bias block (row 0=b1 tiled, 1=b2 tiled, 2=bh, 3=bp)
SLAB_ROWS = R_B + 8               # 336


# ---------------- single fused Pallas kernel (one grid step = one tile of TB states) ---------
def _policy_kernel(ids_ref, slab_ref, out_ref):
    ids = ids_ref[0]                                                     # [NWT, L] int32
    # One-hot directly at conv1's (embedding-folded) input width [NWT, L*NUM_ABC].
    # NOTE: assumes valid ids in [0, NUM_ABC) (torch nn.Embedding would error otherwise).
    flat = ids + lax.broadcasted_iota(jnp.int32, (NWT, L), 1) * NUM_ABC  # id + 10*pos
    lane = lax.broadcasted_iota(jnp.int32, (NWT, L, L * NUM_ABC), 2)
    onehot = (flat[:, :, None] == lane).astype(jnp.float32).sum(axis=1)  # [NWT, 80]

    biases = slab_ref[R_B:R_B + 8, :]                                    # one aligned bias load

    # ---- conv1: block-Toeplitz matmul (embedding folded into the weight), positions on lanes
    h1 = jnp.dot(onehot, slab_ref[R_W1:R_W1 + L * NUM_ABC, :],
                 preferred_element_type=jnp.float32) + biases[0:1, :]    # [NWT, L1*H=192]
    # LeakyReLU (torch default slope 0.01); Dropout = identity (eval)
    h1 = jnp.where(h1 >= 0, h1, 0.01 * h1)

    # ---- conv2: block-Toeplitz matmul, positions on lanes
    h2 = jnp.dot(h1, slab_ref[R_W2:R_W2 + L1 * H, 0:L2 * H],
                 preferred_element_type=jnp.float32) + biases[1:2, 0:L2 * H]  # [NWT, 128]

    # ---- .max(dim=-1)[0] over positions: static 32-lane slices, pure VPU maximums
    word = jnp.maximum(jnp.maximum(h2[:, 0:H], h2[:, H:2 * H]),
                       jnp.maximum(h2[:, 2 * H:3 * H], h2[:, 3 * H:4 * H]))   # [NWT, H]

    # ---- state_repr = mean_w(curr) - mean_w(end) as one tiny matmul with the +/- 1/W matrix
    state = jnp.dot(slab_ref[R_M:R_M + TB, 0:NWT], word,
                    preferred_element_type=jnp.float32)                  # [TB, H]

    # ---- hidden Linear -> Tanh, projection Linear (lane-dense 128-wide output)
    hid = jnp.tanh(jnp.dot(state, slab_ref[R_WH:R_WH + H, 0:H2],
                           preferred_element_type=jnp.float32) + biases[2:3, 0:H2])  # [TB, H2]
    out_ref[...] = (jnp.dot(hid, slab_ref[R_WP:R_WP + H2, 0:NA_PAD],
                            preferred_element_type=jnp.float32) + biases[3:4, 0:NA_PAD])


# ---------------- one-time parameter packing ----------------
def prepare_params(params):
    """Fold the embedding into conv1, build block-Toeplitz conv weights, and pack
    every weight/bias (plus the mean-difference matrix) into a single f32 slab."""
    emb, w1, b1, w2, b2, wh, bh, wp, bp = (np.asarray(p, np.float32) for p in params)
    slab = np.zeros((SLAB_ROWS, SLAB_LANES), np.float32)

    # conv1 Toeplitz with embedding folded in:  rows = (pos p, char c), cols = (out pos q, chan h)
    emb_w1 = np.einsum('ce,keh->kch', emb, w1)                 # [K, NUM_ABC, H]
    for q in range(L1):
        for k in range(K):
            p = q + k
            slab[R_W1 + p * NUM_ABC:R_W1 + (p + 1) * NUM_ABC, q * H:(q + 1) * H] = emb_w1[k]

    # conv2 Toeplitz:  rows = (in pos q, chan h), cols = (out pos r, chan g)
    for r in range(L2):
        for k in range(K):
            q = r + k
            slab[R_W2 + q * H:R_W2 + (q + 1) * H, r * H:(r + 1) * H] = w2[k]

    slab[R_WH:R_WH + H, :H2] = wh
    slab[R_WP:R_WP + H2, :NA] = wp

    # mean-of-difference matrix: state[s] = mean_w curr_word[s,w] - mean_w end_word[w]
    for s in range(TB):
        slab[R_M + s, s * W:(s + 1) * W] = 1.0 / W
        slab[R_M + s, TB * W:NWT] = -1.0 / W

    slab[R_B + 0, :L1 * H] = np.tile(b1[0], L1)
    slab[R_B + 1, :L2 * H] = np.tile(b2[0], L2)
    slab[R_B + 2, :H2] = bh[0]
    slab[R_B + 3, :NA] = bp[0]
    # TODO(synk): on v6e/v7x, store the slab in bf16 (keep f32 MXU accumulation) to halve DMA bytes.
    return jnp.asarray(slab)


# ---------------- wrapper ----------------
@jax.jit
def policy_network_forward(curr_ids, end_ids, slab):
    """curr_ids: [batch, word, pos] int, end_ids: [word, pos] int, slab: packed params."""
    bsz = curr_ids.shape[0]
    num_tiles = pl.cdiv(bsz, TB)
    bpad = num_tiles * TB

    # id plumbing only (tiny int32 arrays); everything else runs inside the kernel
    curr = jnp.zeros((bpad, W, L), jnp.int32).at[:bsz].set(curr_ids.astype(jnp.int32))
    curr = curr.reshape(num_tiles, TB * W, L)
    end = jnp.broadcast_to(end_ids.astype(jnp.int32)[None], (num_tiles, W, L))
    ids = jnp.concatenate([curr, end], axis=1)                 # [num_tiles, NWT, L]

    logits_pad = pl.pallas_call(
        _policy_kernel,
        out_shape=jax.ShapeDtypeStruct((bpad, NA_PAD), jnp.float32),
        grid=(num_tiles,),
        in_specs=[
            pl.BlockSpec((1, NWT, L), lambda i: (i, 0, 0)),                 # per-tile ids
            pl.BlockSpec((SLAB_ROWS, SLAB_LANES), lambda i: (0, 0)),        # VMEM-resident params
        ],
        out_specs=pl.BlockSpec((TB, NA_PAD), lambda i: (i, 0)),             # lane/sublane-dense
        compiler_params=pltpu.CompilerParams(dimension_semantics=("parallel",)),
    )(ids, slab)

    # drop state/lane padding and reshape -> ('batch', 'phase', 'action')
    return logits_pad[:bsz, :NA].reshape(bsz, 7, NUM_ABC)

# TODO(synk): sparse=True (index_select over action indices) and repr_mode != 'state'
# alignment/scatter paths are not implemented; training-mode dropout is not modeled.


# ---------------- pure-JAX reference (same math, no Pallas) ----------------
def _reference_forward(curr_ids, end_ids, params):
    emb, w1, b1, w2, b2, wh, bh, wp, bp = params
    bsz, nw, lw = curr_ids.shape

    def conv_stack(x):  # x: [N, L, E]
        h1 = sum(jnp.einsum('nte,eh->nth', x[:, k:k + L1, :], w1[k]) for k in range(K)) + b1[0]
        h1 = jnp.where(h1 >= 0, h1, 0.01 * h1)
        h2 = sum(jnp.einsum('nth,hg->ntg', h1[:, k:k + L2, :], w2[k]) for k in range(K)) + b2[0]
        return jnp.max(h2, axis=1)

    cw = conv_stack(emb[curr_ids].reshape(bsz * nw, lw, E)).reshape(bsz, nw, H)
    ew = conv_stack(emb[end_ids])
    state = jnp.mean(cw - ew[None], axis=1)
    hid = jnp.tanh(state @ wh + bh[0])
    return (hid @ wp + bp[0]).reshape(bsz, 7, NUM_ABC)


if __name__ == "__main__":
    keys = jax.random.split(jax.random.PRNGKey(0), 13)
    scale = 0.1
    params = (
        jax.random.normal(keys[0], (NUM_ABC, E), jnp.float32) * scale,       # char embedding table
        jax.random.normal(keys[1], (K, E, H), jnp.float32) * scale,          # conv1 weight [K, C_in, C_out]
        jax.random.normal(keys[2], (1, H), jnp.float32) * scale,             # conv1 bias
        jax.random.normal(keys[3], (K, H, H), jnp.float32) * scale,          # conv2 weight
        jax.random.normal(keys[4], (1, H), jnp.float32) * scale,             # conv2 bias
        jax.random.normal(keys[5], (H, H2), jnp.float32) * scale,            # hidden Linear weight (transposed)
        jax.random.normal(keys[6], (1, H2), jnp.float32) * scale,            # hidden Linear bias
        jax.random.normal(keys[7], (H2, 7 * NUM_ABC), jnp.float32) * scale,  # potential_block weight (transposed)
        jax.random.normal(keys[8], (1, 7 * NUM_ABC), jnp.float32) * scale,   # potential_block bias
    )
    slab = prepare_params(params)

    # small shapes from the module: batch=2 states, 4 words per state, 8 positions per word
    curr_ids = jax.random.randint(keys[9], (B, W, L), 0, NUM_ABC)
    end_ids = jax.random.randint(keys[10], (W, L), 0, NUM_ABC)

    out = policy_network_forward(curr_ids, end_ids, slab)
    jax.block_until_ready(out)
    ref = _reference_forward(curr_ids, end_ids, params)
    assert out.shape == (B, 7, NUM_ABC)
    assert jnp.allclose(out, ref, atol=1e-4, rtol=1e-4)

    # batched-RL-states path (grid > 1): weights DMA'd once, tiles sharded "parallel"
    B_BIG = 16
    curr_big = jax.random.randint(keys[11], (B_BIG, W, L), 0, NUM_ABC)
    end_big = jax.random.randint(keys[12], (W, L), 0, NUM_ABC)
    out_big = policy_network_forward(curr_big, end_big, slab)
    jax.block_until_ready(out_big)
    ref_big = _reference_forward(curr_big, end_big, params)
    assert out_big.shape == (B_BIG, 7, NUM_ABC)
    assert jnp.allclose(out_big, ref_big, atol=1e-4, rtol=1e-4)

    print("KERNEL_OK")
</pallas_src>

<mosaic_0001>
module attributes {stable_mosaic.version = 11 : i64} {
  func.func @_policy_kernel(%arg0: i32, %arg1: memref<1x36x8xi32, #tpu.memory_space<vmem>>, %arg2: memref<336x192xf32, #tpu.memory_space<vmem>>, %arg3: memref<8x128xf32, #tpu.memory_space<vmem>>) attributes {dimension_semantics = [#tpu.dimension_semantics<parallel>], iteration_bounds = array<i64: 1>, scalar_prefetch = 0 : i64, scratch_operands = 0 : i64, tpu.core_type = #tpu.core_type<tc>, window_params = [{transform_indices = @transform_0, window_bounds = array<i64: 1, 36, 8>}, {pipeline_mode = #tpu.pipeline_mode<synchronous>, transform_indices = @transform_1, window_bounds = array<i64: 336, 192>}, {transform_indices = @transform_2, window_bounds = array<i64: 8, 128>}]} {
    %c0 = arith.constant 0 : index
    %c0_0 = arith.constant 0 : index
    %c0_1 = arith.constant 0 : index
    %0 = vector.load %arg1[%c0, %c0_0, %c0_1] : memref<1x36x8xi32, #tpu.memory_space<vmem>>, vector<1x36x8xi32>
    %1 = vector.shape_cast %0 : vector<1x36x8xi32> to vector<36x8xi32>
    %2 = tpu.iota {dimensions = array<i32: 1>} : vector<36x8xi32>
    %c10_i32 = arith.constant 10 : i32
    %3 = vector.broadcast %c10_i32 : i32 to vector<36x8xi32>
    %4 = arith.muli %2, %3 : vector<36x8xi32>
    %5 = arith.addi %1, %4 : vector<36x8xi32>
    %6 = tpu.iota {dimensions = array<i32: 2>} : vector<36x8x80xi32>
    %7 = vector.shape_cast %5 : vector<36x8xi32> to vector<36x8x1xi32>
    %8 = vector.broadcast %7 : vector<36x8x1xi32> to vector<36x8x80xi32>
    %9 = arith.cmpi eq, %8, %6 : vector<36x8x80xi32>
    %10 = arith.extui %9 : vector<36x8x80xi1> to vector<36x8x80xi32>
    %11 = arith.sitofp %10 : vector<36x8x80xi32> to vector<36x8x80xf32>
    %cst = arith.constant dense<0.000000e+00> : vector<36x80xf32>
    %12 = vector.multi_reduction <add>, %11, %cst [1] : vector<36x8x80xf32> to vector<36x80xf32>
    %c328 = arith.constant 328 : index
    %c0_2 = arith.constant 0 : index
    %13 = vector.load %arg2[%c328, %c0_2] : memref<336x192xf32, #tpu.memory_space<vmem>>, vector<8x192xf32>
    %c0_3 = arith.constant 0 : index
    %c0_4 = arith.constant 0 : index
    %14 = vector.load %arg2[%c0_3, %c0_4] : memref<336x192xf32, #tpu.memory_space<vmem>>, vector<80x192xf32>
    %cst_5 = arith.constant dense<0.000000e+00> : vector<36x192xf32>
    %15 = tpu.matmul %12, %14, %cst_5 {dimension_numbers = #tpu.dot_dimension_numbers<[1], [0], [0], [1], [0, 0, 1, 1], [], []>} : vector<36x80xf32>, vector<80x192xf32>, vector<36x192xf32> -> vector<36x192xf32>
    %16 = vector.extract_strided_slice %13 {offsets = [0, 0], sizes = [1, 192], strides = [1, 1]} : vector<8x192xf32> to vector<1x192xf32>
    %17 = vector.broadcast %16 : vector<1x192xf32> to vector<36x192xf32>
    %18 = arith.addf %15, %17 : vector<36x192xf32>
    %cst_6 = arith.constant 0.000000e+00 : f32
    %19 = vector.broadcast %cst_6 : f32 to vector<36x192xf32>
    %20 = arith.cmpf oge, %18, %19 : vector<36x192xf32>
    %cst_7 = arith.constant 0.00999999977 : f32
    %21 = vector.broadcast %cst_7 : f32 to vector<36x192xf32>
    %22 = arith.mulf %21, %18 : vector<36x192xf32>
    %23 = arith.select %20, %18, %22 : vector<36x192xi1>, vector<36x192xf32>
    %c80 = arith.constant 80 : index
    %c0_8 = arith.constant 0 : index
    %24 = vector.load %arg2[%c80, %c0_8] : memref<336x192xf32, #tpu.memory_space<vmem>>, vector<192x128xf32>
    %cst_9 = arith.constant dense<0.000000e+00> : vector<36x128xf32>
    %25 = tpu.matmul %23, %24, %cst_9 {dimension_numbers = #tpu.dot_dimension_numbers<[1], [0], [0], [1], [0, 0, 1, 1], [], []>} : vector<36x192xf32>, vector<192x128xf32>, vector<36x128xf32> -> vector<36x128xf32>
    %26 = vector.extract_strided_slice %13 {offsets = [1, 0], sizes = [1, 128], strides = [1, 1]} : vector<8x192xf32> to vector<1x128xf32>
    %27 = vector.broadcast %26 : vector<1x128xf32> to vector<36x128xf32>
    %28 = arith.addf %25, %27 : vector<36x128xf32>
    %29 = vector.extract_strided_slice %28 {offsets = [0, 0], sizes = [36, 32], strides = [1, 1]} : vector<36x128xf32> to vector<36x32xf32>
    %30 = vector.extract_strided_slice %28 {offsets = [0, 32], sizes = [36, 32], strides = [1, 1]} : vector<36x128xf32> to vector<36x32xf32>
    %31 = arith.maximumf %29, %30 : vector<36x32xf32>
    %32 = vector.extract_strided_slice %28 {offsets = [0, 64], sizes = [36, 32], strides = [1, 1]} : vector<36x128xf32> to vector<36x32xf32>
    %33 = vector.extract_strided_slice %28 {offsets = [0, 96], sizes = [36, 32], strides = [1, 1]} : vector<36x128xf32> to vector<36x32xf32>
    %34 = arith.maximumf %32, %33 : vector<36x32xf32>
    %35 = arith.maximumf %31, %34 : vector<36x32xf32>
    %c320 = arith.constant 320 : index
    %c0_10 = arith.constant 0 : index
    %36 = vector.load %arg2[%c320, %c0_10] : memref<336x192xf32, #tpu.memory_space<vmem>>, vector<8x36xf32>
    %cst_11 = arith.constant dense<0.000000e+00> : vector<8x32xf32>
    %37 = tpu.matmul %36, %35, %cst_11 {dimension_numbers = #tpu.dot_dimension_numbers<[1], [0], [0], [1], [0, 0, 1, 1], [], []>} : vector<8x36xf32>, vector<36x32xf32>, vector<8x32xf32> -> vector<8x32xf32>
    %c272 = arith.constant 272 : index
    %c0_12 = arith.constant 0 : index
    %38 = vector.load %arg2[%c272, %c0_12] : memref<336x192xf32, #tpu.memory_space<vmem>>, vector<32x16xf32>
    %cst_13 = arith.constant dense<0.000000e+00> : vector<8x16xf32>
    %39 = tpu.matmul %37, %38, %cst_13 {dimension_numbers = #tpu.dot_dimension_numbers<[1], [0], [0], [1], [0, 0, 1, 1], [], []>} : vector<8x32xf32>, vector<32x16xf32>, vector<8x16xf32> -> vector<8x16xf32>
    %40 = vector.extract_strided_slice %13 {offsets = [2, 0], sizes = [1, 16], strides = [1, 1]} : vector<8x192xf32> to vector<1x16xf32>
    %41 = vector.broadcast %40 : vector<1x16xf32> to vector<8x16xf32>
    %42 = arith.addf %39, %41 : vector<8x16xf32>
    %43 = math.tanh %42 : vector<8x16xf32>
    %c304 = arith.constant 304 : index
    %c0_14 = arith.constant 0 : index
    %44 = vector.load %arg2[%c304, %c0_14] : memref<336x192xf32, #tpu.memory_space<vmem>>, vector<16x128xf32>
    %cst_15 = arith.constant dense<0.000000e+00> : vector<8x128xf32>
    %45 = tpu.matmul %43, %44, %cst_15 {dimension_numbers = #tpu.dot_dimension_numbers<[1], [0], [0], [1], [0, 0, 1, 1], [], []>} : vector<8x16xf32>, vector<16x128xf32>, vector<8x128xf32> -> vector<8x128xf32>
    %46 = vector.extract_strided_slice %13 {offsets = [3, 0], sizes = [1, 128], strides = [1, 1]} : vector<8x192xf32> to vector<1x128xf32>
    %47 = vector.broadcast %46 : vector<1x128xf32> to vector<8x128xf32>
    %48 = arith.addf %45, %47 : vector<8x128xf32>
    %c0_16 = arith.constant 0 : index
    %c0_17 = arith.constant 0 : index
    %49 = vector.load %arg3[%c0_16, %c0_17] : memref<8x128xf32, #tpu.memory_space<vmem>>, vector<8x128xf32>
    tpu.vector_store %arg3[%c0_16, %c0_17], %48 {strides = array<i32>} : memref<8x128xf32, #tpu.memory_space<vmem>>, vector<8x128xf32>,
    return
  }
  func.func @transform_0(%arg0: i32) -> (i32, i32, i32) {
    %c0_i32 = arith.constant 0 : i32
    %c0_i32_0 = arith.constant 0 : i32
    %c0_i32_1 = arith.constant 0 : i32
    return %arg0, %c0_i32, %c0_i32_0 : i32, i32, i32
  }
  func.func @transform_1(%arg0: i32) -> (i32, i32) {
    %c0_i32 = arith.constant 0 : i32
    %c0_i32_0 = arith.constant 0 : i32
    %c0_i32_1 = arith.constant 0 : i32
    return %c0_i32, %c0_i32_0 : i32, i32
  }
  func.func @transform_2(%arg0: i32) -> (i32, i32) {
    %c0_i32 = arith.constant 0 : i32
    %c0_i32_0 = arith.constant 0 : i32
    return %arg0, %c0_i32 : i32, i32
  }
}

</mosaic_0001>

<llo_original>
// kernel: policy_network_forward.1
$region0: #{policy_network_forward.1}
  #allocation0 [shape = 'u32[]', space=smem, size = 0x4, offset = 0x4, fixed_abs, tag = 'smem constant byte address 0x4 - core index']
  #allocation1 [shape = 'u32[144,128]{1,0:T(1,128)}', space=vmem, size = 0x12000, scoped, tag = 'internal scratch']
  %s0 = inlined_call_operand.vmem [shape: s32[1,36,8], index: 0, kind: input, shape index: {}]
  %s1 = inlined_call_operand.vmem [shape: f32[336,192], index: 1, kind: input, shape index: {}]
  %s2 = inlined_call_operand.vmem [shape: f32[8,128], index: 2, kind: output, shape index: {}]
  %s3 = sld [smem:[#allocation0]]
  $region18: #{policy_network_forward.1} parent=0
    _
  %s5 = ssub.s32 1, %s3
  %s6 = scalar_select 0, %s5, %s3
  // Predicated region
  $region2: #{policy_network_forward.1} parent=0 // pred_check
    _
  $region3: #{policy_network_forward.1} parent=0 // pred_check_branch
    %8 = sbr.rel (0) target = $region5
  $region4: #{policy_network_forward.1} parent=0 // pred_region
    _
  $region5: #{policy_network_forward.1} parent=0 // pred_fallthru
    _
  // Predicated region
  $region6: #{policy_network_forward.1} parent=0 // pred_check
    _
  $region7: #{policy_network_forward.1} parent=0 // pred_check_branch
    %10 = sbr.rel (0) target = $region9
  $region8: #{policy_network_forward.1} parent=0 // pred_region
    _
  $region9: #{policy_network_forward.1} parent=0 // pred_fallthru
    _
  %v11 = vld [vmem:[%s0] sm:$0xff]
  %v12 = vld [vmem:[%s0 + $0x8] sm:$0xff]
  %v13 = vld [vmem:[%s0 + $0x10] sm:$0xff]
  %v14 = vld [vmem:[%s0 + $0x18] sm:$0xff]
  %v15 = vld [vmem:[%s0 + $0x20] sm:$0xf]
  %v16 = vlaneseq
  %v17 = vand.u32 %v16, 127
  %v18 = vmul.u32 %v17, 10
  %v19 = vadd.s32 %v11, %v18
  %v20 = vadd.s32 %v12, %v18
  %v21 = vadd.s32 %v13, %v18
  %v22 = vadd.s32 %v14, %v18
  %v23 = vadd.s32 %v15, %v18
  %v24 = vlaneseq
  %v25 = vshrl.u32 %v24, 7
  %v26 = vsub.s32 0, %v25
  %v27 = vrot.slane %v19, %v26
  %29 = vbcast.lane.b32.xlu0 %v27, 256
  %v30 = vpop.permute.xlu0 %29
  %v31 = vlaneseq
  %v32 = vshrl.u32 %v31, 7
  %v33 = vsub.s32 1, %v32
  %v34 = vrot.slane %v19, %v33
  %36 = vbcast.lane.b32.xlu0 %v34, 256
  %v37 = vpop.permute.xlu0 %36
  %v38 = vlaneseq
  %v39 = vshrl.u32 %v38, 7
  %v40 = vsub.s32 2, %v39
  %v41 = vrot.slane %v19, %v40
  %43 = vbcast.lane.b32.xlu0 %v41, 256
  %v44 = vpop.permute.xlu0 %43
  %v45 = vlaneseq
  %v46 = vshrl.u32 %v45, 7
  %v47 = vsub.s32 3, %v46
  %v48 = vrot.slane %v19, %v47
  %50 = vbcast.lane.b32.xlu0 %v48, 256
  %v51 = vpop.permute.xlu0 %50
  %v52 = vlaneseq
  %v53 = vshrl.u32 %v52, 7
  %v54 = vsub.s32 4, %v53
  %v55 = vrot.slane %v19, %v54
  %57 = vbcast.lane.b32.xlu0 %v55, 256
  %v58 = vpop.permute.xlu0 %57
  %v59 = vlaneseq
  %v60 = vshrl.u32 %v59, 7
  %v61 = vsub.s32 5, %v60
  %v62 = vrot.slane %v19, %v61
  %64 = vbcast.lane.b32.xlu0 %v62, 256
  %v65 = vpop.permute.xlu0 %64
  %v66 = vlaneseq
  %v67 = vshrl.u32 %v66, 7
  %v68 = vsub.s32 6, %v67
  %v69 = vrot.slane %v19, %v68
  %71 = vbcast.lane.b32.xlu0 %v69, 256
  %v72 = vpop.permute.xlu0 %71
  %v73 = vlaneseq
  %v74 = vshrl.u32 %v73, 7
  %v75 = vsub.s32 7, %v74
  %v76 = vrot.slane %v19, %v75
  %78 = vbcast.lane.b32.xlu0 %v76, 256
  %v79 = vpop.permute.xlu0 %78
  %v80 = vlaneseq
  %v81 = vshrl.u32 %v80, 7
  %v82 = vsub.s32 0, %v81
  %v83 = vrot.slane %v20, %v82
  %85 = vbcast.lane.b32.xlu0 %v83, 256
  %v86 = vpop.permute.xlu0 %85
  %v87 = vlaneseq
  %v88 = vshrl.u32 %v87, 7
  %v89 = vsub.s32 1, %v88
  %v90 = vrot.slane %v20, %v89
  %92 = vbcast.lane.b32.xlu0 %v90, 256
  %v93 = vpop.permute.xlu0 %92
  %v94 = vlaneseq
  %v95 = vshrl.u32 %v94, 7
  %v96 = vsub.s32 2, %v95
  %v97 = vrot.slane %v20, %v96
  %99 = vbcast.lane.b32.xlu0 %v97, 256
  %v100 = vpop.permute.xlu0 %99
  %v101 = vlaneseq
  %v102 = vshrl.u32 %v101, 7
  %v103 = vsub.s32 3, %v102
  %v104 = vrot.slane %v20, %v103
  %106 = vbcast.lane.b32.xlu0 %v104, 256
  %v107 = vpop.permute.xlu0 %106
  %v108 = vlaneseq
  %v109 = vshrl.u32 %v108, 7
  %v110 = vsub.s32 4, %v109
  %v111 = vrot.slane %v20, %v110
  %113 = vbcast.lane.b32.xlu0 %v111, 256
  %v114 = vpop.permute.xlu0 %113
  %v115 = vlaneseq
  %v116 = vshrl.u32 %v115, 7
  %v117 = vsub.s32 5, %v116
  %v118 = vrot.slane %v20, %v117
  %120 = vbcast.lane.b32.xlu0 %v118, 256
  %v121 = vpop.permute.xlu0 %120
  %v122 = vlaneseq
  %v123 = vshrl.u32 %v122, 7
  %v124 = vsub.s32 6, %v123
  %v125 = vrot.slane %v20, %v124
  %127 = vbcast.lane.b32.xlu0 %v125, 256
  %v128 = vpop.permute.xlu0 %127
  %v129 = vlaneseq
  %v130 = vshrl.u32 %v129, 7
  %v131 = vsub.s32 7, %v130
  %v132 = vrot.slane %v20, %v131
  %134 = vbcast.lane.b32.xlu0 %v132, 256
  %v135 = vpop.permute.xlu0 %134
  %v136 = vlaneseq
  %v137 = vshrl.u32 %v136, 7
  %v138 = vsub.s32 0, %v137
  %v139 = vrot.slane %v21, %v138
  %141 = vbcast.lane.b32.xlu0 %v139, 256
  %v142 = vpop.permute.xlu0 %141
  %v143 = vlaneseq
  %v144 = vshrl.u32 %v143, 7
  %v145 = vsub.s32 1, %v144
  %v146 = vrot.slane %v21, %v145
  %148 = vbcast.lane.b32.xlu0 %v146, 256
  %v149 = vpop.permute.xlu0 %148
  %v150 = vlaneseq
  %v151 = vshrl.u32 %v150, 7
  %v152 = vsub.s32 2, %v151
  %v153 = vrot.slane %v21, %v152
  %155 = vbcast.lane.b32.xlu0 %v153, 256
  %v156 = vpop.permute.xlu0 %155
  %v157 = vlaneseq
  %v158 = vshrl.u32 %v157, 7
  %v159 = vsub.s32 3, %v158
  %v160 = vrot.slane %v21, %v159
  %162 = vbcast.lane.b32.xlu0 %v160, 256
  %v163 = vpop.permute.xlu0 %162
  %v164 = vlaneseq
  %v165 = vshrl.u32 %v164, 7
  %v166 = vsub.s32 4, %v165
  %v167 = vrot.slane %v21, %v166
  %169 = vbcast.lane.b32.xlu0 %v167, 256
  %v170 = vpop.permute.xlu0 %169
  %v171 = vlaneseq
  %v172 = vshrl.u32 %v171, 7
  %v173 = vsub.s32 5, %v172
  %v174 = vrot.slane %v21, %v173
  %176 = vbcast.lane.b32.xlu0 %v174, 256
  %v177 = vpop.permute.xlu0 %176
  %v178 = vlaneseq
  %v179 = vshrl.u32 %v178, 7
  %v180 = vsub.s32 6, %v179
  %v181 = vrot.slane %v21, %v180
  %183 = vbcast.lane.b32.xlu0 %v181, 256
  %v184 = vpop.permute.xlu0 %183
  %v185 = vlaneseq
  %v186 = vshrl.u32 %v185, 7
  %v187 = vsub.s32 7, %v186
  %v188 = vrot.slane %v21, %v187
  %190 = vbcast.lane.b32.xlu0 %v188, 256
  %v191 = vpop.permute.xlu0 %190
  %v192 = vlaneseq
  %v193 = vshrl.u32 %v192, 7
  %v194 = vsub.s32 0, %v193
  %v195 = vrot.slane %v22, %v194
  %197 = vbcast.lane.b32.xlu0 %v195, 256
  %v198 = vpop.permute.xlu0 %197
  %v199 = vlaneseq
  %v200 = vshrl.u32 %v199, 7
  %v201 = vsub.s32 1, %v200
  %v202 = vrot.slane %v22, %v201
  %204 = vbcast.lane.b32.xlu0 %v202, 256
  %v205 = vpop.permute.xlu0 %204
  %v206 = vlaneseq
  %v207 = vshrl.u32 %v206, 7
  %v208 = vsub.s32 2, %v207
  %v209 = vrot.slane %v22, %v208
  %211 = vbcast.lane.b32.xlu0 %v209, 256
  %v212 = vpop.permute.xlu0 %211
  %v213 = vlaneseq
  %v214 = vshrl.u32 %v213, 7
  %v215 = vsub.s32 3, %v214
  %v216 = vrot.slane %v22, %v215
  %218 = vbcast.lane.b32.xlu0 %v216, 256
  %v219 = vpop.permute.xlu0 %218
  %v220 = vlaneseq
  %v221 = vshrl.u32 %v220, 7
  %v222 = vsub.s32 4, %v221
  %v223 = vrot.slane %v22, %v222
  %225 = vbcast.lane.b32.xlu0 %v223, 256
  %v226 = vpop.permute.xlu0 %225
  %v227 = vlaneseq
  %v228 = vshrl.u32 %v227, 7
  %v229 = vsub.s32 5, %v228
  %v230 = vrot.slane %v22, %v229
  %232 = vbcast.lane.b32.xlu0 %v230, 256
  %v233 = vpop.permute.xlu0 %232
  %v234 = vlaneseq
  %v235 = vshrl.u32 %v234, 7
  %v236 = vsub.s32 6, %v235
  %v237 = vrot.slane %v22, %v236
  %239 = vbcast.lane.b32.xlu0 %v237, 256
  %v240 = vpop.permute.xlu0 %239
  %v241 = vlaneseq
  %v242 = vshrl.u32 %v241, 7
  %v243 = vsub.s32 7, %v242
  %v244 = vrot.slane %v22, %v243
  %246 = vbcast.lane.b32.xlu0 %v244, 256
  %v247 = vpop.permute.xlu0 %246
  %v248 = vlaneseq
  %v249 = vshrl.u32 %v248, 7
  %v250 = vsub.s32 0, %v249
  %v251 = vrot.slane %v23, %v250
  %253 = vbcast.lane.b32.xlu0 %v251, 256
  %v254 = vpop.permute.xlu0 %253
  %v255 = vlaneseq
  %v256 = vshrl.u32 %v255, 7
  %v257 = vsub.s32 1, %v256
  %v258 = vrot.slane %v23, %v257
  %260 = vbcast.lane.b32.xlu0 %v258, 256
  %v261 = vpop.permute.xlu0 %260
  %v262 = vlaneseq
  %v263 = vshrl.u32 %v262, 7
  %v264 = vsub.s32 2, %v263
  %v265 = vrot.slane %v23, %v264
  %267 = vbcast.lane.b32.xlu0 %v265, 256
  %v268 = vpop.permute.xlu0 %267
  %v269 = vlaneseq
  %v270 = vshrl.u32 %v269, 7
  %v271 = vsub.s32 3, %v270
  %v272 = vrot.slane %v23, %v271
  %274 = vbcast.lane.b32.xlu0 %v272, 256
  %v275 = vpop.permute.xlu0 %274
  %vm276 = vcmp.eq.s32.totalorder %v30, %v17
  %vm277 = vcmp.eq.s32.totalorder %v37, %v17
  %vm278 = vcmp.eq.s32.totalorder %v44, %v17
  %vm279 = vcmp.eq.s32.totalorder %v51, %v17
  %vm280 = vcmp.eq.s32.totalorder %v58, %v17
  %vm281 = vcmp.eq.s32.totalorder %v65, %v17
  %vm282 = vcmp.eq.s32.totalorder %v72, %v17
  %vm283 = vcmp.eq.s32.totalorder %v79, %v17
  %vm284 = vcmp.eq.s32.totalorder %v86, %v17
  %vm285 = vcmp.eq.s32.totalorder %v93, %v17
  %vm286 = vcmp.eq.s32.totalorder %v100, %v17
  %vm287 = vcmp.eq.s32.totalorder %v107, %v17
  %vm288 = vcmp.eq.s32.totalorder %v114, %v17
  %vm289 = vcmp.eq.s32.totalorder %v121, %v17
  %vm290 = vcmp.eq.s32.totalorder %v128, %v17
  %vm291 = vcmp.eq.s32.totalorder %v135, %v17
  %vm292 = vcmp.eq.s32.totalorder %v142, %v17
  %vm293 = vcmp.eq.s32.totalorder %v149, %v17
  %vm294 = vcmp.eq.s32.totalorder %v156, %v17
  %vm295 = vcmp.eq.s32.totalorder %v163, %v17
  %vm296 = vcmp.eq.s32.totalorder %v170, %v17
  %vm297 = vcmp.eq.s32.totalorder %v177, %v17
  %vm298 = vcmp.eq.s32.totalorder %v184, %v17
  %vm299 = vcmp.eq.s32.totalorder %v191, %v17
  %vm300 = vcmp.eq.s32.totalorder %v198, %v17
  %vm301 = vcmp.eq.s32.totalorder %v205, %v17
  %vm302 = vcmp.eq.s32.totalorder %v212, %v17
  %vm303 = vcmp.eq.s32.totalorder %v219, %v17
  %vm304 = vcmp.eq.s32.totalorder %v226, %v17
  %vm305 = vcmp.eq.s32.totalorder %v233, %v17
  %vm306 = vcmp.eq.s32.totalorder %v240, %v17
  %vm307 = vcmp.eq.s32.totalorder %v247, %v17
  %vm308 = vcmp.eq.s32.totalorder %v254, %v17
  %vm309 = vcmp.eq.s32.totalorder %v261, %v17
  %vm310 = vcmp.eq.s32.totalorder %v268, %v17
  %vm311 = vcmp.eq.s32.totalorder %v275, %v17
  %v312 = vsel %vm276, 1, 0
  %v313 = vsel %vm277, 1, 0
  %v314 = vsel %vm278, 1, 0
  %v315 = vsel %vm279, 1, 0
  %v316 = vsel %vm280, 1, 0
  %v317 = vsel %vm281, 1, 0
  %v318 = vsel %vm282, 1, 0
  %v319 = vsel %vm283, 1, 0
  %v320 = vsel %vm284, 1, 0
  %v321 = vsel %vm285, 1, 0
  %v322 = vsel %vm286, 1, 0
  %v323 = vsel %vm287, 1, 0
  %v324 = vsel %vm288, 1, 0
  %v325 = vsel %vm289, 1, 0
  %v326 = vsel %vm290, 1, 0
  %v327 = vsel %vm291, 1, 0
  %v328 = vsel %vm292, 1, 0
  %v329 = vsel %vm293, 1, 0
  %v330 = vsel %vm294, 1, 0
  %v331 = vsel %vm295, 1, 0
  %v332 = vsel %vm296, 1, 0
  %v333 = vsel %vm297, 1, 0
  %v334 = vsel %vm298, 1, 0
  %v335 = vsel %vm299, 1, 0
  %v336 = vsel %vm300, 1, 0
  %v337 = vsel %vm301, 1, 0
  %v338 = vsel %vm302, 1, 0
  %v339 = vsel %vm303, 1, 0
  %v340 = vsel %vm304, 1, 0
  %v341 = vsel %vm305, 1, 0
  %v342 = vsel %vm306, 1, 0
  %v343 = vsel %vm307, 1, 0
  %v344 = vsel %vm308, 1, 0
  %v345 = vsel %vm309, 1, 0
  %v346 = vsel %vm310, 1, 0
  %v347 = vsel %vm311, 1, 0
  %v348 = vcvt.s32.f32 %v312
  %v349 = vcvt.s32.f32 %v313
  %v350 = vcvt.s32.f32 %v314
  %v351 = vcvt.s32.f32 %v315
  %v352 = vcvt.s32.f32 %v316
  %v353 = vcvt.s32.f32 %v317
  %v354 = vcvt.s32.f32 %v318
  %v355 = vcvt.s32.f32 %v319
  %v356 = vcvt.s32.f32 %v320
  %v357 = vcvt.s32.f32 %v321
  %v358 = vcvt.s32.f32 %v322
  %v359 = vcvt.s32.f32 %v323
  %v360 = vcvt.s32.f32 %v324
  %v361 = vcvt.s32.f32 %v325
  %v362 = vcvt.s32.f32 %v326
  %v363 = vcvt.s32.f32 %v327
  %v364 = vcvt.s32.f32 %v328
  %v365 = vcvt.s32.f32 %v329
  %v366 = vcvt.s32.f32 %v330
  %v367 = vcvt.s32.f32 %v331
  %v368 = vcvt.s32.f32 %v332
  %v369 = vcvt.s32.f32 %v333
  %v370 = vcvt.s32.f32 %v334
  %v371 = vcvt.s32.f32 %v335
  %v372 = vcvt.s32.f32 %v336
  %v373 = vcvt.s32.f32 %v337
  %v374 = vcvt.s32.f32 %v338
  %v375 = vcvt.s32.f32 %v339
  %v376 = vcvt.s32.f32 %v340
  %v377 = vcvt.s32.f32 %v341
  %v378 = vcvt.s32.f32 %v342
  %v379 = vcvt.s32.f32 %v343
  %v380 = vcvt.s32.f32 %v344
  %v381 = vcvt.s32.f32 %v345
  %v382 = vcvt.s32.f32 %v346
  %v383 = vcvt.s32.f32 %v347
  %vm384 = vcmask 654336
  %v385 = vsel %vm384, %v348, 0.0
  %v386 = vrot.slane %v385, 4
  %v387 = vadd.f32 %v385, %v386
  %v388 = vrot.slane %v387, 2
  %v389 = vadd.f32 %v387, %v388
  %v390 = vrot.slane %v389, 1
  %v391 = vadd.f32 %v389, %v390
  %v392 = vsel %vm384, %v349, 0.0
  %v393 = vrot.slane %v392, 4
  %v394 = vadd.f32 %v392, %v393
  %v395 = vrot.slane %v394, 2
  %v396 = vadd.f32 %v394, %v395
  %v397 = vrot.slane %v396, 1
  %v398 = vadd.f32 %v396, %v397
  %v399 = vsel %vm384, %v350, 0.0
  %v400 = vrot.slane %v399, 4
  %v401 = vadd.f32 %v399, %v400
  %v402 = vrot.slane %v401, 2
  %v403 = vadd.f32 %v401, %v402
  %v404 = vrot.slane %v403, 1
  %v405 = vadd.f32 %v403, %v404
  %v406 = vsel %vm384, %v351, 0.0
  %v407 = vrot.slane %v406, 4
  %v408 = vadd.f32 %v406, %v407
  %v409 = vrot.slane %v408, 2
  %v410 = vadd.f32 %v408, %v409
  %v411 = vrot.slane %v410, 1
  %v412 = vadd.f32 %v410, %v411
  %v413 = vsel %vm384, %v352, 0.0
  %v414 = vrot.slane %v413, 4
  %v415 = vadd.f32 %v413, %v414
  %v416 = vrot.slane %v415, 2
  %v417 = vadd.f32 %v415, %v416
  %v418 = vrot.slane %v417, 1
  %v419 = vadd.f32 %v417, %v418
  %v420 = vsel %vm384, %v353, 0.0
  %v421 = vrot.slane %v420, 4
  %v422 = vadd.f32 %v420, %v421
  %v423 = vrot.slane %v422, 2
  %v424 = vadd.f32 %v422, %v423
  %v425 = vrot.slane %v424, 1
  %v426 = vadd.f32 %v424, %v425
  %v427 = vsel %vm384, %v354, 0.0
  %v428 = vrot.slane %v427, 4
  %v429 = vadd.f32 %v427, %v428
  %v430 = vrot.slane %v429, 2
  %v431 = vadd.f32 %v429, %v430
  %v432 = vrot.slane %v431, 1
  %v433 = vadd.f32 %v431, %v432
  %v434 = vsel %vm384, %v355, 0.0
  %v435 = vrot.slane %v434, 4
  %v436 = vadd.f32 %v434, %v435
  %v437 = vrot.slane %v436, 2
  %v438 = vadd.f32 %v436, %v437
  %v439 = vrot.slane %v438, 1
  %v440 = vadd.f32 %v438, %v439
  %v441 = vsel %vm384, %v356, 0.0
  %v442 = vrot.slane %v441, 4
  %v443 = vadd.f32 %v441, %v442
  %v444 = vrot.slane %v443, 2
  %v445 = vadd.f32 %v443, %v444
  %v446 = vrot.slane %v445, 1
  %v447 = vadd.f32 %v445, %v446
  %v448 = vsel %vm384, %v357, 0.0
  %v449 = vrot.slane %v448, 4
  %v450 = vadd.f32 %v448, %v449
  %v451 = vrot.slane %v450, 2
  %v452 = vadd.f32 %v450, %v451
  %v453 = vrot.slane %v452, 1
  %v454 = vadd.f32 %v452, %v453
  %v455 = vsel %vm384, %v358, 0.0
  %v456 = vrot.slane %v455, 4
  %v457 = vadd.f32 %v455, %v456
  %v458 = vrot.slane %v457, 2
  %v459 = vadd.f32 %v457, %v458
  %v460 = vrot.slane %v459, 1
  %v461 = vadd.f32 %v459, %v460
  %v462 = vsel %vm384, %v359, 0.0
  %v463 = vrot.slane %v462, 4
  %v464 = vadd.f32 %v462, %v463
  %v465 = vrot.slane %v464, 2
  %v466 = vadd.f32 %v464, %v465
  %v467 = vrot.slane %v466, 1
  %v468 = vadd.f32 %v466, %v467
  %v469 = vsel %vm384, %v360, 0.0
  %v470 = vrot.slane %v469, 4
  %v471 = vadd.f32 %v469, %v470
  %v472 = vrot.slane %v471, 2
  %v473 = vadd.f32 %v471, %v472
  %v474 = vrot.slane %v473, 1
  %v475 = vadd.f32 %v473, %v474
  %v476 = vsel %vm384, %v361, 0.0
  %v477 = vrot.slane %v476, 4
  %v478 = vadd.f32 %v476, %v477
  %v479 = vrot.slane %v478, 2
  %v480 = vadd.f32 %v478, %v479
  %v481 = vrot.slane %v480, 1
  %v482 = vadd.f32 %v480, %v481
  %v483 = vsel %vm384, %v362, 0.0
  %v484 = vrot.slane %v483, 4
  %v485 = vadd.f32 %v483, %v484
  %v486 = vrot.slane %v485, 2
  %v487 = vadd.f32 %v485, %v486
  %v488 = vrot.slane %v487, 1
  %v489 = vadd.f32 %v487, %v488
  %v490 = vsel %vm384, %v363, 0.0
  %v491 = vrot.slane %v490, 4
  %v492 = vadd.f32 %v490, %v491
  %v493 = vrot.slane %v492, 2
  %v494 = vadd.f32 %v492, %v493
  %v495 = vrot.slane %v494, 1
  %v496 = vadd.f32 %v494, %v495
  %v497 = vsel %vm384, %v364, 0.0
  %v498 = vrot.slane %v497, 4
  %v499 = vadd.f32 %v497, %v498
  %v500 = vrot.slane %v499, 2
  %v501 = vadd.f32 %v499, %v500
  %v502 = vrot.slane %v501, 1
  %v503 = vadd.f32 %v501, %v502
  %v504 = vsel %vm384, %v365, 0.0
  %v505 = vrot.slane %v504, 4
  %v506 = vadd.f32 %v504, %v505
  %v507 = vrot.slane %v506, 2
  %v508 = vadd.f32 %v506, %v507
  %v509 = vrot.slane %v508, 1
  %v510 = vadd.f32 %v508, %v509
  %v511 = vsel %vm384, %v366, 0.0
  %v512 = vrot.slane %v511, 4
  %v513 = vadd.f32 %v511, %v512
  %v514 = vrot.slane %v513, 2
  %v515 = vadd.f32 %v513, %v514
  %v516 = vrot.slane %v515, 1
  %v517 = vadd.f32 %v515, %v516
  %v518 = vsel %vm384, %v367, 0.0
  %v519 = vrot.slane %v518, 4
  %v520 = vadd.f32 %v518, %v519
  %v521 = vrot.slane %v520, 2
  %v522 = vadd.f32 %v520, %v521
  %v523 = vrot.slane %v522, 1
  %v524 = vadd.f32 %v522, %v523
  %v525 = vsel %vm384, %v368, 0.0
  %v526 = vrot.slane %v525, 4
  %v527 = vadd.f32 %v525, %v526
  %v528 = vrot.slane %v527, 2
  %v529 = vadd.f32 %v527, %v528
  %v530 = vrot.slane %v529, 1
  %v531 = vadd.f32 %v529, %v530
  %v532 = vsel %vm384, %v369, 0.0
  %v533 = vrot.slane %v532, 4
  %v534 = vadd.f32 %v532, %v533
  %v535 = vrot.slane %v534, 2
  %v536 = vadd.f32 %v534, %v535
  %v537 = vrot.slane %v536, 1
  %v538 = vadd.f32 %v536, %v537
  %v539 = vsel %vm384, %v370, 0.0
  %v540 = vrot.slane %v539, 4
  %v541 = vadd.f32 %v539, %v540
  %v542 = vrot.slane %v541, 2
  %v543 = vadd.f32 %v541, %v542
  %v544 = vrot.slane %v543, 1
  %v545 = vadd.f32 %v543, %v544
  %v546 = vsel %vm384, %v371, 0.0
  %v547 = vrot.slane %v546, 4
  %v548 = vadd.f32 %v546, %v547
  %v549 = vrot.slane %v548, 2
  %v550 = vadd.f32 %v548, %v549
  %v551 = vrot.slane %v550, 1
  %v552 = vadd.f32 %v550, %v551
  %v553 = vsel %vm384, %v372, 0.0
  %v554 = vrot.slane %v553, 4
  %v555 = vadd.f32 %v553, %v554
  %v556 = vrot.slane %v555, 2
  %v557 = vadd.f32 %v555, %v556
  %v558 = vrot.slane %v557, 1
  %v559 = vadd.f32 %v557, %v558
  %v560 = vsel %vm384, %v373, 0.0
  %v561 = vrot.slane %v560, 4
  %v562 = vadd.f32 %v560, %v561
  %v563 = vrot.slane %v562, 2
  %v564 = vadd.f32 %v562, %v563
  %v565 = vrot.slane %v564, 1
  %v566 = vadd.f32 %v564, %v565
  %v567 = vsel %vm384, %v374, 0.0
  %v568 = vrot.slane %v567, 4
  %v569 = vadd.f32 %v567, %v568
  %v570 = vrot.slane %v569, 2
  %v571 = vadd.f32 %v569, %v570
  %v572 = vrot.slane %v571, 1
  %v573 = vadd.f32 %v571, %v572
  %v574 = vsel %vm384, %v375, 0.0
  %v575 = vrot.slane %v574, 4
  %v576 = vadd.f32 %v574, %v575
  %v577 = vrot.slane %v576, 2
  %v578 = vadd.f32 %v576, %v577
  %v579 = vrot.slane %v578, 1
  %v580 = vadd.f32 %v578, %v579
  %v581 = vsel %vm384, %v376, 0.0
  %v582 = vrot.slane %v581, 4
  %v583 = vadd.f32 %v581, %v582
  %v584 = vrot.slane %v583, 2
  %v585 = vadd.f32 %v583, %v584
  %v586 = vrot.slane %v585, 1
  %v587 = vadd.f32 %v585, %v586
  %v588 = vsel %vm384, %v377, 0.0
  %v589 = vrot.slane %v588, 4
  %v590 = vadd.f32 %v588, %v589
  %v591 = vrot.slane %v590, 2
  %v592 = vadd.f32 %v590, %v591
  %v593 = vrot.slane %v592, 1
  %v594 = vadd.f32 %v592, %v593
  %v595 = vsel %vm384, %v378, 0.0
  %v596 = vrot.slane %v595, 4
  %v597 = vadd.f32 %v595, %v596
  %v598 = vrot.slane %v597, 2
  %v599 = vadd.f32 %v597, %v598
  %v600 = vrot.slane %v599, 1
  %v601 = vadd.f32 %v599, %v600
  %v602 = vsel %vm384, %v379, 0.0
  %v603 = vrot.slane %v602, 4
  %v604 = vadd.f32 %v602, %v603
  %v605 = vrot.slane %v604, 2
  %v606 = vadd.f32 %v604, %v605
  %v607 = vrot.slane %v606, 1
  %v608 = vadd.f32 %v606, %v607
  %v609 = vsel %vm384, %v380, 0.0
  %v610 = vrot.slane %v609, 4
  %v611 = vadd.f32 %v609, %v610
  %v612 = vrot.slane %v611, 2
  %v613 = vadd.f32 %v611, %v612
  %v614 = vrot.slane %v613, 1
  %v615 = vadd.f32 %v613, %v614
  %v616 = vsel %vm384, %v381, 0.0
  %v617 = vrot.slane %v616, 4
  %v618 = vadd.f32 %v616, %v617
  %v619 = vrot.slane %v618, 2
  %v620 = vadd.f32 %v618, %v619
  %v621 = vrot.slane %v620, 1
  %v622 = vadd.f32 %v620, %v621
  %v623 = vsel %vm384, %v382, 0.0
  %v624 = vrot.slane %v623, 4
  %v625 = vadd.f32 %v623, %v624
  %v626 = vrot.slane %v625, 2
  %v627 = vadd.f32 %v625, %v626
  %v628 = vrot.slane %v627, 1
  %v629 = vadd.f32 %v627, %v628
  %v630 = vsel %vm384, %v383, 0.0
  %v631 = vrot.slane %v630, 4
  %v632 = vadd.f32 %v630, %v631
  %v633 = vrot.slane %v632, 2
  %v634 = vadd.f32 %v632, %v633
  %v635 = vrot.slane %v634, 1
  %v636 = vadd.f32 %v634, %v635
  %v637 = vld [vmem:[%s1 + $0x290] sm:$0xff]
  %v638 = vld [vmem:[%s1 + $0x298] sm:$0xff]
  %v639 = vld [vmem:[%s1] sm:$0xff]
  %v640 = vld [vmem:[%s1 + $0x8] sm:$0xff]
  %v641 = vld [vmem:[%s1 + $0x10] sm:$0xff]
  %v642 = vld [vmem:[%s1 + $0x18] sm:$0xff]
  %v643 = vld [vmem:[%s1 + $0x20] sm:$0xff]
  %v644 = vld [vmem:[%s1 + $0x28] sm:$0xff]
  %v645 = vld [vmem:[%s1 + $0x30] sm:$0xff]
  %v646 = vld [vmem:[%s1 + $0x38] sm:$0xff]
  %v647 = vld [vmem:[%s1 + $0x40] sm:$0xff]
  %v648 = vld [vmem:[%s1 + $0x48] sm:$0xff]
  %v649 = vld [vmem:[%s1 + $0x50] sm:$0xff]
  %v650 = vld [vmem:[%s1 + $0x58] sm:$0xff]
  %v651 = vld [vmem:[%s1 + $0x60] sm:$0xff]
  %v652 = vld [vmem:[%s1 + $0x68] sm:$0xff]
  %v653 = vld [vmem:[%s1 + $0x70] sm:$0xff]
  %v654 = vld [vmem:[%s1 + $0x78] sm:$0xff]
  %v655 = vld [vmem:[%s1 + $0x80] sm:$0xff]
  %v656 = vld [vmem:[%s1 + $0x88] sm:$0xff]
  %v657 = vld [vmem:[%s1 + $0x90] sm:$0xff]
  %v658 = vld [vmem:[%s1 + $0x98] sm:$0xff]
  %v659 = vlaneseq
  %v660 = vshrl.u32 %v659, 7
  %v661 = vsub.s32 0, %v660
  %v662 = vrot.slane %v637, %v661
  %v663 = vlaneseq
  %v664 = vshrl.u32 %v663, 7
  %v665 = vsub.s32 0, %v664
  %v666 = vrot.slane %v638, %v665
  %vm703 = vcmask 1041409
  %v704 = vsel %vm703, %v398, %v391
  %vm705 = vcmask 1042434
  %v706 = vsel %vm705, %v405, %v704
  %vm707 = vcmask 1043459
  %v708 = vsel %vm707, %v412, %v706
  %vm709 = vcmask 1044484
  %v710 = vsel %vm709, %v419, %v708
  %vm711 = vcmask 1045509
  %v712 = vsel %vm711, %v426, %v710
  %vm713 = vcmask 1046534
  %v714 = vsel %vm713, %v433, %v712
  %vm715 = vcmask 1047559
  %v716 = vsel %vm715, %v440, %v714
  %v717 = vsel %vm703, %v454, %v447
  %v718 = vsel %vm705, %v461, %v717
  %v719 = vsel %vm707, %v468, %v718
  %v720 = vsel %vm709, %v475, %v719
  %v721 = vsel %vm711, %v482, %v720
  %v722 = vsel %vm713, %v489, %v721
  %v723 = vsel %vm715, %v496, %v722
  %v724 = vsel %vm703, %v510, %v503
  %v725 = vsel %vm705, %v517, %v724
  %v726 = vsel %vm707, %v524, %v725
  %v727 = vsel %vm709, %v531, %v726
  %v728 = vsel %vm711, %v538, %v727
  %v729 = vsel %vm713, %v545, %v728
  %v730 = vsel %vm715, %v552, %v729
  %v731 = vsel %vm703, %v566, %v559
  %v732 = vsel %vm705, %v573, %v731
  %v733 = vsel %vm707, %v580, %v732
  %v734 = vsel %vm709, %v587, %v733
  %v735 = vsel %vm711, %v594, %v734
  %v736 = vsel %vm713, %v601, %v735
  %v737 = vsel %vm715, %v608, %v736
  %v738 = vsel %vm703, %v622, %v615
  %v739 = vsel %vm705, %v629, %v738
  %v740 = vsel %vm707, %v636, %v739
  %v741 = vsel %vm384, %v716, 0
  %v743 = vsel %vm384, %v723, 0
  %v745 = vsel %vm384, %v730, 0
  %v747 = vsel %vm384, %v737, 0
  %v749 = vsel %vm384, %v740, 0
  %751 = vmatprep.subr.mxu0 0.0
  %752 = vmatpush1.msra.mxu0 0.0
  %753 = vmatprep.subr.mxu0 0.0
  %754 = vmatpush1.msra.mxu0 0.0
  %755 = vmatprep.subr.mxu0 0.0
  %756 = vmatpush1.msra.mxu0 0.0
  %757 = vmatprep.subr.mxu0 0.0
  %758 = vmatpush1.msra.mxu0 0.0
  %759 = vmatprep.subr.mxu0 0.0
  %760 = vmatpush1.msra.mxu0 0.0
  %761 = vmatprep.subr.mxu0 0.0
  %762 = vmatpush1.msra.mxu0 0.0
  %763 = vmatprep.subr.mxu0 %v658
  %764 = vmatpush1.msra.mxu0 %v657
  %765 = vmatprep.subr.mxu0 %v656
  %766 = vmatpush1.msra.mxu0 %v655
  %767 = vmatprep.subr.mxu0 %v654
  %768 = vmatpush1.msra.mxu0 %v653
  %769 = vmatprep.subr.mxu0 %v652
  %770 = vmatpush1.msra.mxu0 %v651
  %771 = vmatprep.subr.mxu0 %v650
  %772 = vmatpush1.msra.mxu0 %v649
  %773 = vmatprep.subr.mxu0 %v648
  %774 = vmatpush1.msra.mxu0 %v647
  %775 = vmatprep.subr.mxu0 %v646
  %776 = vmatpush1.msra.mxu0 %v645
  %777 = vmatprep.subr.mxu0 %v644
  %778 = vmatpush1.msra.mxu0 %v643
  %779 = vmatprep.subr.mxu0 %v642
  %780 = vmatpush1.msra.mxu0 %v641
  %781 = vmatprep.subr.mxu0 %v640
  %782 = vmatpush1.msra.mxu0 %v639
  %783 = vmatprep.subr.mxu0 0.0
  %784 = vmatpush2.msra.mxu0 0.0
  %785 = vmatprep.subr.mxu0 0.0
  %786 = vmatpush2.msra.mxu0 0.0
  %787 = vmatprep.subr.mxu0 0.0
  %788 = vmatpush2.msra.mxu0 0.0
  %789 = vmatprep.subr.mxu0 0.0
  %790 = vmatpush2.msra.mxu0 0.0
  %791 = vmatprep.subr.mxu0 0.0
  %792 = vmatpush2.msra.mxu0 0.0
  %793 = vmatprep.subr.mxu0 0.0
  %794 = vmatpush2.msra.mxu0 0.0
  %795 = vmatprep.subr.mxu0 0.0
  %796 = vmatpush2.msra.mxu0 0.0
  %797 = vmatprep.subr.mxu0 0.0
  %798 = vmatpush2.msra.mxu0 0.0
  %799 = vmatprep.subr.mxu0 0.0
  %800 = vmatpush2.msra.mxu0 0.0
  %801 = vmatprep.subr.mxu0 0.0
  %802 = vmatpush2.msra.mxu0 0.0
  %803 = vmatprep.subr.mxu0 0.0
  %804 = vmatpush2.msra.mxu0 0.0
  %805 = vmatprep.subr.mxu0 0.0
  %806 = vmatpush2.msra.mxu0 0.0
  %807 = vmatprep.subr.mxu0 0.0
  %808 = vmatpush2.msra.mxu0 0.0
  %809 = vmatprep.subr.mxu0 0.0
  %810 = vmatpush2.msra.mxu0 0.0
  %811 = vmatprep.subr.mxu0 0.0
  %812 = vmatpush2.msra.mxu0 0.0
  %813 = vmatprep.subr.mxu0 0.0
  %814 = vmatpush2.msra.mxu0 0.0
  %815 = vmatprep.mubr.f32.mxu0 0.0
  %816 = vmatmul.mubr.f32.gmra.mxu0 %v741
  %v817 = vpop.f32.mrf.mxu0
  %v818 = vadd.f32 %v662, %v817
  %v819 = vpop.f32.mrf.mxu0
  %v820 = vadd.f32 %v666, %v819
  %821 = vmatprep.mubr.f32.mxu0 0.0
  %822 = vmatmul.mubr.f32.gmra.mxu0 %v743
  %v823 = vpop.f32.mrf.mxu0
  %v824 = vadd.f32 %v662, %v823
  %v825 = vpop.f32.mrf.mxu0
  %v826 = vadd.f32 %v666, %v825
  %827 = vmatprep.mubr.f32.mxu0 0.0
  %828 = vmatmul.mubr.f32.gmra.mxu0 %v745
  %v829 = vpop.f32.mrf.mxu0
  %v830 = vadd.f32 %v662, %v829
  %v831 = vpop.f32.mrf.mxu0
  %v832 = vadd.f32 %v666, %v831
  %833 = vmatprep.mubr.f32.mxu0 0.0
  %834 = vmatmul.mubr.f32.gmra.mxu0 %v747
  %v835 = vpop.f32.mrf.mxu0
  %v836 = vadd.f32 %v662, %v835
  %v837 = vpop.f32.mrf.mxu0
  %v838 = vadd.f32 %v666, %v837
  %839 = vmatprep.mubr.f32.mxu0 0.0
  %840 = vmatmul.mubr.f32.gmra.mxu0 %v749
  %v841 = vpop.f32.mrf.mxu0
  %v842 = vadd.f32 %v662, %v841
  %v843 = vpop.f32.mrf.mxu0
  %v844 = vadd.f32 %v666, %v843
  %845 = vdwg.mxu0
  %vm846 = vcmp.ge.f32.partialorder %v818, 0.0
  %vm847 = vcmp.ge.f32.partialorder %v820, 0.0
  %vm848 = vcmp.ge.f32.partialorder %v824, 0.0
  %vm849 = vcmp.ge.f32.partialorder %v826, 0.0
  %vm850 = vcmp.ge.f32.partialorder %v830, 0.0
  %vm851 = vcmp.ge.f32.partialorder %v832, 0.0
  %vm852 = vcmp.ge.f32.partialorder %v836, 0.0
  %vm853 = vcmp.ge.f32.partialorder %v838, 0.0
  %vm854 = vcmp.ge.f32.partialorder %v842, 0.0
  %vm855 = vcmp.ge.f32.partialorder %v844, 0.0
  %v856 = vmul.f32 %v818, 0.01
  %v857 = vmul.f32 %v820, 0.01
  %v858 = vmul.f32 %v824, 0.01
  %v859 = vmul.f32 %v826, 0.01
  %v860 = vmul.f32 %v830, 0.01
  %v861 = vmul.f32 %v832, 0.01
  %v862 = vmul.f32 %v836, 0.01
  %v863 = vmul.f32 %v838, 0.01
  %v864 = vmul.f32 %v842, 0.01
  %v865 = vmul.f32 %v844, 0.01
  %v866 = vsel %vm846, %v818, %v856
  %v867 = vsel %vm847, %v820, %v857
  %v868 = vsel %vm848, %v824, %v858
  %v869 = vsel %vm849, %v826, %v859
  %v870 = vsel %vm850, %v830, %v860
  %v871 = vsel %vm851, %v832, %v861
  %v872 = vsel %vm852, %v836, %v862
  %v873 = vsel %vm853, %v838, %v863
  %v874 = vsel %vm854, %v842, %v864
  %v875 = vsel %vm855, %v844, %v865
  %v876 = vld [vmem:[%s1 + $0xa0] sm:$0xff]
  %v877 = vld [vmem:[%s1 + $0xb0] sm:$0xff]
  %v878 = vld [vmem:[%s1 + $0xc0] sm:$0xff]
  %v879 = vld [vmem:[%s1 + $0xd0] sm:$0xff]
  %v880 = vld [vmem:[%s1 + $0xe0] sm:$0xff]
  %v881 = vld [vmem:[%s1 + $0xf0] sm:$0xff]
  %v882 = vld [vmem:[%s1 + $0x100] sm:$0xff]
  %v883 = vld [vmem:[%s1 + $0x110] sm:$0xff]
  %v884 = vld [vmem:[%s1 + $0x120] sm:$0xff]
  %v885 = vld [vmem:[%s1 + $0x130] sm:$0xff]
  %v886 = vld [vmem:[%s1 + $0x140] sm:$0xff]
  %v887 = vld [vmem:[%s1 + $0x150] sm:$0xff]
  %v888 = vld [vmem:[%s1 + $0x160] sm:$0xff]
  %v889 = vld [vmem:[%s1 + $0x170] sm:$0xff]
  %v890 = vld [vmem:[%s1 + $0x180] sm:$0xff]
  %v891 = vld [vmem:[%s1 + $0x190] sm:$0xff]
  %v892 = vld [vmem:[%s1 + $0x1a0] sm:$0xff]
  %v893 = vld [vmem:[%s1 + $0x1b0] sm:$0xff]
  %v894 = vld [vmem:[%s1 + $0x1c0] sm:$0xff]
  %v895 = vld [vmem:[%s1 + $0x1d0] sm:$0xff]
  %v896 = vld [vmem:[%s1 + $0x1e0] sm:$0xff]
  %v897 = vld [vmem:[%s1 + $0x1f0] sm:$0xff]
  %v898 = vld [vmem:[%s1 + $0x200] sm:$0xff]
  %v899 = vld [vmem:[%s1 + $0x210] sm:$0xff]
  %v900 = vlaneseq
  %v901 = vshrl.u32 %v900, 7
  %v902 = vsub.s32 1, %v901
  %v903 = vrot.slane %v637, %v902
  %vm904 = vcmask 523264
  %v906 = vsel %vm904, %v867, 0
  %v909 = vsel %vm904, %v869, 0
  %v912 = vsel %vm904, %v871, 0
  %v915 = vsel %vm904, %v873, 0
  %v918 = vsel %vm904, %v875, 0
  %920 = vmatprep.subr.mxu0 0.0
  %921 = vmatpush1.msra.mxu0 %v891
  %922 = vmatprep.subr.mxu0 0.0
  %923 = vmatpush1.msra.mxu0 %v890
  %924 = vmatprep.subr.mxu0 0.0
  %925 = vmatpush1.msra.mxu0 %v889
  %926 = vmatprep.subr.mxu0 0.0
  %927 = vmatpush1.msra.mxu0 %v888
  %928 = vmatprep.subr.mxu0 0.0
  %929 = vmatpush1.msra.mxu0 %v887
  %930 = vmatprep.subr.mxu0 0.0
  %931 = vmatpush1.msra.mxu0 %v886
  %932 = vmatprep.subr.mxu0 0.0
  %933 = vmatpush1.msra.mxu0 %v885
  %934 = vmatprep.subr.mxu0 0.0
  %935 = vmatpush1.msra.mxu0 %v884
  %936 = vmatprep.subr.mxu0 0.0
  %937 = vmatpush1.msra.mxu0 %v883
  %938 = vmatprep.subr.mxu0 0.0
  %939 = vmatpush1.msra.mxu0 %v882
  %940 = vmatprep.subr.mxu0 0.0
  %941 = vmatpush1.msra.mxu0 %v881
  %942 = vmatprep.subr.mxu0 0.0
  %943 = vmatpush1.msra.mxu0 %v880
  %944 = vmatprep.subr.mxu0 0.0
  %945 = vmatpush1.msra.mxu0 %v879
  %946 = vmatprep.subr.mxu0 0.0
  %947 = vmatpush1.msra.mxu0 %v878
  %948 = vmatprep.subr.mxu0 0.0
  %949 = vmatpush1.msra.mxu0 %v877
  %950 = vmatprep.subr.mxu0 0.0
  %951 = vmatpush1.msra.mxu0 %v876
  %952 = vmatprep.subr.mxu0 0.0
  %953 = vmatpush2.msra.mxu0 0.0
  %954 = vmatprep.subr.mxu0 0.0
  %955 = vmatpush2.msra.mxu0 0.0
  %956 = vmatprep.subr.mxu0 0.0
  %957 = vmatpush2.msra.mxu0 0.0
  %958 = vmatprep.subr.mxu0 0.0
  %959 = vmatpush2.msra.mxu0 0.0
  %960 = vmatprep.subr.mxu0 0.0
  %961 = vmatpush2.msra.mxu0 0.0
  %962 = vmatprep.subr.mxu0 0.0
  %963 = vmatpush2.msra.mxu0 0.0
  %964 = vmatprep.subr.mxu0 0.0
  %965 = vmatpush2.msra.mxu0 0.0
  %966 = vmatprep.subr.mxu0 0.0
  %967 = vmatpush2.msra.mxu0 0.0
  %968 = vmatprep.subr.mxu0 0.0
  %969 = vmatpush2.msra.mxu0 %v899
  %970 = vmatprep.subr.mxu0 0.0
  %971 = vmatpush2.msra.mxu0 %v898
  %972 = vmatprep.subr.mxu0 0.0
  %973 = vmatpush2.msra.mxu0 %v897
  %974 = vmatprep.subr.mxu0 0.0
  %975 = vmatpush2.msra.mxu0 %v896
  %976 = vmatprep.subr.mxu0 0.0
  %977 = vmatpush2.msra.mxu0 %v895
  %978 = vmatprep.subr.mxu0 0.0
  %979 = vmatpush2.msra.mxu0 %v894
  %980 = vmatprep.subr.mxu0 0.0
  %981 = vmatpush2.msra.mxu0 %v893
  %982 = vmatprep.subr.mxu0 0.0
  %983 = vmatpush2.msra.mxu0 %v892
  %984 = vmatprep.mubr.f32.mxu0 %v906
  %985 = vmatmul.mubr.f32.gmra.mxu0 %v866
  %v986 = vpop.f32.mrf.mxu0
  %v987 = vadd.f32 %v903, %v986
  %v988 = vpop.f32.mrf.mxu0
  %989 = vmatprep.mubr.f32.mxu0 %v909
  %990 = vmatmul.mubr.f32.gmra.mxu0 %v868
  %v991 = vpop.f32.mrf.mxu0
  %v992 = vadd.f32 %v903, %v991
  %v993 = vpop.f32.mrf.mxu0
  %994 = vmatprep.mubr.f32.mxu0 %v912
  %995 = vmatmul.mubr.f32.gmra.mxu0 %v870
  %v996 = vpop.f32.mrf.mxu0
  %v997 = vadd.f32 %v903, %v996
  %v998 = vpop.f32.mrf.mxu0
  %999 = vmatprep.mubr.f32.mxu0 %v915
  %1000 = vmatmul.mubr.f32.gmra.mxu0 %v872
  %v1001 = vpop.f32.mrf.mxu0
  %v1002 = vadd.f32 %v903, %v1001
  %v1003 = vpop.f32.mrf.mxu0
  %1004 = vmatprep.mubr.f32.mxu0 %v918
  %1005 = vmatmul.mubr.f32.gmra.mxu0 %v874
  %v1006 = vpop.f32.mrf.mxu0
  %v1007 = vadd.f32 %v903, %v1006
  %v1008 = vpop.f32.mrf.mxu0
  %1009 = vdwg.mxu0
  %1015 = vrot.lane.b32.xlu0 %v987, 96
  %v1016 = vpop.permute.xlu0 %1015
  %1017 = vrot.lane.b32.xlu0 %v992, 96
  %v1018 = vpop.permute.xlu0 %1017
  %1019 = vrot.lane.b32.xlu0 %v997, 96
  %v1020 = vpop.permute.xlu0 %1019
  %1021 = vrot.lane.b32.xlu0 %v1002, 96
  %v1022 = vpop.permute.xlu0 %1021
  %1023 = vrot.lane.b32.xlu0 %v1007, 96
  %v1024 = vpop.permute.xlu0 %1023
  %v1030 = vmax.f32 %v987, %v1016
  %v1031 = vmax.f32 %v992, %v1018
  %v1032 = vmax.f32 %v997, %v1020
  %v1033 = vmax.f32 %v1002, %v1022
  %v1034 = vmax.f32 %v1007, %v1024
  %1040 = vrot.lane.b32.xlu0 %v1030, 64
  %v1041 = vpop.permute.xlu0 %1040
  %1042 = vrot.lane.b32.xlu0 %v1031, 64
  %v1043 = vpop.permute.xlu0 %1042
  %1044 = vrot.lane.b32.xlu0 %v1032, 64
  %v1045 = vpop.permute.xlu0 %1044
  %1046 = vrot.lane.b32.xlu0 %v1033, 64
  %v1047 = vpop.permute.xlu0 %1046
  %1048 = vrot.lane.b32.xlu0 %v1034, 64
  %v1049 = vpop.permute.xlu0 %1048
  %v1055 = vmax.f32 %v1030, %v1041
  %v1056 = vmax.f32 %v1031, %v1043
  %v1057 = vmax.f32 %v1032, %v1045
  %v1058 = vmax.f32 %v1033, %v1047
  %v1059 = vmax.f32 %v1034, %v1049
  %v1060 = vld [vmem:[%s1 + $0x280] sm:$0xff]
  %vm1061 = vcmask 293888
  %v1063 = vsel %vm1061, %v1060, 0
  %vm1065 = vcmask 1043456
  %v1067 = vsel %vm1065, %v1059, 0
  %1069 = vmatprep.subr.mxu0 0.0
  %1070 = vmatpush1.msra.mxu0 0.0
  %1071 = vmatprep.subr.mxu0 0.0
  %1072 = vmatpush1.msra.mxu0 0.0
  %1073 = vmatprep.subr.mxu0 0.0
  %1074 = vmatpush1.msra.mxu0 0.0
  %1075 = vmatprep.subr.mxu0 0.0
  %1076 = vmatpush1.msra.mxu0 0.0
  %1077 = vmatprep.subr.mxu0 0.0
  %1078 = vmatpush1.msra.mxu0 0.0
  %1079 = vmatprep.subr.mxu0 0.0
  %1080 = vmatpush1.msra.mxu0 0.0
  %1081 = vmatprep.subr.mxu0 0.0
  %1082 = vmatpush1.msra.mxu0 0.0
  %1083 = vmatprep.subr.mxu0 0.0
  %1084 = vmatpush1.msra.mxu0 0.0
  %1085 = vmatprep.subr.mxu0 0.0
  %1086 = vmatpush1.msra.mxu0 0.0
  %1087 = vmatprep.subr.mxu0 0.0
  %1088 = vmatpush1.msra.mxu0 0.0
  %1089 = vmatprep.subr.mxu0 0.0
  %1090 = vmatpush1.msra.mxu0 0.0
  %1091 = vmatprep.subr.mxu0 0.0
  %1092 = vmatpush1.msra.mxu0 %v1067
  %1093 = vmatprep.subr.mxu0 0.0
  %1094 = vmatpush1.msra.mxu0 %v1058
  %1095 = vmatprep.subr.mxu0 0.0
  %1096 = vmatpush1.msra.mxu0 %v1057
  %1097 = vmatprep.subr.mxu0 0.0
  %1098 = vmatpush1.msra.mxu0 %v1056
  %1099 = vmatprep.subr.mxu0 0.0
  %1100 = vmatpush1.msra.mxu0 %v1055
  %1101 = vmatprep.subr.mxu0 0.0
  %1102 = vmatpush2.msra.mxu0 0.0
  %1103 = vmatprep.subr.mxu0 0.0
  %1104 = vmatpush2.msra.mxu0 0.0
  %1105 = vmatprep.subr.mxu0 0.0
  %1106 = vmatpush2.msra.mxu0 0.0
  %1107 = vmatprep.subr.mxu0 0.0
  %1108 = vmatpush2.msra.mxu0 0.0
  %1109 = vmatprep.subr.mxu0 0.0
  %1110 = vmatpush2.msra.mxu0 0.0
  %1111 = vmatprep.subr.mxu0 0.0
  %1112 = vmatpush2.msra.mxu0 0.0
  %1113 = vmatprep.subr.mxu0 0.0
  %1114 = vmatpush2.msra.mxu0 0.0
  %1115 = vmatprep.subr.mxu0 0.0
  %1116 = vmatpush2.msra.mxu0 0.0
  %1117 = vmatprep.subr.mxu0 0.0
  %1118 = vmatpush2.msra.mxu0 0.0
  %1119 = vmatprep.subr.mxu0 0.0
  %1120 = vmatpush2.msra.mxu0 0.0
  %1121 = vmatprep.subr.mxu0 0.0
  %1122 = vmatpush2.msra.mxu0 0.0
  %1123 = vmatprep.subr.mxu0 0.0
  %1124 = vmatpush2.msra.mxu0 0.0
  %1125 = vmatprep.subr.mxu0 0.0
  %1126 = vmatpush2.msra.mxu0 0.0
  %1127 = vmatprep.subr.mxu0 0.0
  %1128 = vmatpush2.msra.mxu0 0.0
  %1129 = vmatprep.subr.mxu0 0.0
  %1130 = vmatpush2.msra.mxu0 0.0
  %1131 = vmatprep.subr.mxu0 0.0
  %1132 = vmatpush2.msra.mxu0 0.0
  %1133 = vmatprep.mubr.f32.mxu0 0.0
  %1134 = vmatmul.mubr.f32.gmra.mxu0 %v1063
  %v1135 = vpop.f32.mrf.mxu0
  %v1136 = vadd.f32 0.0, %v1135
  %v1137 = vpop.f32.mrf.mxu0
  %1138 = vdwg.mxu0
  %v1139 = vld [vmem:[%s1 + $0x220] sm:$0xff]
  %v1140 = vld [vmem:[%s1 + $0x230] sm:$0xff]
  %v1141 = vld [vmem:[%s1 + $0x240] sm:$0xff]
  %v1142 = vld [vmem:[%s1 + $0x250] sm:$0xff]
  %v1143 = vlaneseq
  %v1144 = vshrl.u32 %v1143, 7
  %v1145 = vsub.s32 2, %v1144
  %v1146 = vrot.slane %v637, %v1145
  %vm1147 = vcmask 261120
  %v1149 = vsel %vm1147, %v1136, 0
  %1151 = vmatprep.subr.mxu0 0.0
  %1152 = vmatpush1.msra.mxu0 0.0
  %1153 = vmatprep.subr.mxu0 0.0
  %1154 = vmatpush1.msra.mxu0 0.0
  %1155 = vmatprep.subr.mxu0 0.0
  %1156 = vmatpush1.msra.mxu0 0.0
  %1157 = vmatprep.subr.mxu0 0.0
  %1158 = vmatpush1.msra.mxu0 0.0
  %1159 = vmatprep.subr.mxu0 0.0
  %1160 = vmatpush1.msra.mxu0 0.0
  %1161 = vmatprep.subr.mxu0 0.0
  %1162 = vmatpush1.msra.mxu0 0.0
  %1163 = vmatprep.subr.mxu0 0.0
  %1164 = vmatpush1.msra.mxu0 0.0
  %1165 = vmatprep.subr.mxu0 0.0
  %1166 = vmatpush1.msra.mxu0 0.0
  %1167 = vmatprep.subr.mxu0 0.0
  %1168 = vmatpush1.msra.mxu0 0.0
  %1169 = vmatprep.subr.mxu0 0.0
  %1170 = vmatpush1.msra.mxu0 0.0
  %1171 = vmatprep.subr.mxu0 0.0
  %1172 = vmatpush1.msra.mxu0 0.0
  %1173 = vmatprep.subr.mxu0 0.0
  %1174 = vmatpush1.msra.mxu0 0.0
  %1175 = vmatprep.subr.mxu0 0.0
  %1176 = vmatpush1.msra.mxu0 %v1142
  %1177 = vmatprep.subr.mxu0 0.0
  %1178 = vmatpush1.msra.mxu0 %v1141
  %1179 = vmatprep.subr.mxu0 0.0
  %1180 = vmatpush1.msra.mxu0 %v1140
  %1181 = vmatprep.subr.mxu0 0.0
  %1182 = vmatpush1.msra.mxu0 %v1139
  %1183 = vmatprep.subr.mxu0 0.0
  %1184 = vmatpush2.msra.mxu0 0.0
  %1185 = vmatprep.subr.mxu0 0.0
  %1186 = vmatpush2.msra.mxu0 0.0
  %1187 = vmatprep.subr.mxu0 0.0
  %1188 = vmatpush2.msra.mxu0 0.0
  %1189 = vmatprep.subr.mxu0 0.0
  %1190 = vmatpush2.msra.mxu0 0.0
  %1191 = vmatprep.subr.mxu0 0.0
  %1192 = vmatpush2.msra.mxu0 0.0
  %1193 = vmatprep.subr.mxu0 0.0
  %1194 = vmatpush2.msra.mxu0 0.0
  %1195 = vmatprep.subr.mxu0 0.0
  %1196 = vmatpush2.msra.mxu0 0.0
  %1197 = vmatprep.subr.mxu0 0.0
  %1198 = vmatpush2.msra.mxu0 0.0
  %1199 = vmatprep.subr.mxu0 0.0
  %1200 = vmatpush2.msra.mxu0 0.0
  %1201 = vmatprep.subr.mxu0 0.0
  %1202 = vmatpush2.msra.mxu0 0.0
  %1203 = vmatprep.subr.mxu0 0.0
  %1204 = vmatpush2.msra.mxu0 0.0
  %1205 = vmatprep.subr.mxu0 0.0
  %1206 = vmatpush2.msra.mxu0 0.0
  %1207 = vmatprep.subr.mxu0 0.0
  %1208 = vmatpush2.msra.mxu0 0.0
  %1209 = vmatprep.subr.mxu0 0.0
  %1210 = vmatpush2.msra.mxu0 0.0
  %1211 = vmatprep.subr.mxu0 0.0
  %1212 = vmatpush2.msra.mxu0 0.0
  %1213 = vmatprep.subr.mxu0 0.0
  %1214 = vmatpush2.msra.mxu0 0.0
  %1215 = vmatprep.mubr.f32.mxu0 0.0
  %1216 = vmatmul.mubr.f32.gmra.mxu0 %v1149
  %v1217 = vpop.f32.mrf.mxu0
  %v1218 = vadd.f32 %v1146, %v1217
  %v1219 = vpop.f32.mrf.mxu0
  %1220 = vdwg.mxu0
  %v1221 = vtanh.pop %v1218
  %v1222 = vld [vmem:[%s1 + $0x260] sm:$0xff]
  %v1223 = vld [vmem:[%s1 + $0x270] sm:$0xff]
  %v1224 = vlaneseq
  %v1225 = vshrl.u32 %v1224, 7
  %v1226 = vsub.s32 3, %v1225
  %v1227 = vrot.slane %v637, %v1226
  %vm1228 = vcmask 130048
  %v1230 = vsel %vm1228, %v1221, 0
  %1232 = vmatprep.subr.mxu0 0.0
  %1233 = vmatpush1.msra.mxu0 0.0
  %1234 = vmatprep.subr.mxu0 0.0
  %1235 = vmatpush1.msra.mxu0 0.0
  %1236 = vmatprep.subr.mxu0 0.0
  %1237 = vmatpush1.msra.mxu0 0.0
  %1238 = vmatprep.subr.mxu0 0.0
  %1239 = vmatpush1.msra.mxu0 0.0
  %1240 = vmatprep.subr.mxu0 0.0
  %1241 = vmatpush1.msra.mxu0 0.0
  %1242 = vmatprep.subr.mxu0 0.0
  %1243 = vmatpush1.msra.mxu0 0.0
  %1244 = vmatprep.subr.mxu0 0.0
  %1245 = vmatpush1.msra.mxu0 0.0
  %1246 = vmatprep.subr.mxu0 0.0
  %1247 = vmatpush1.msra.mxu0 0.0
  %1248 = vmatprep.subr.mxu0 0.0
  %1249 = vmatpush1.msra.mxu0 0.0
  %1250 = vmatprep.subr.mxu0 0.0
  %1251 = vmatpush1.msra.mxu0 0.0
  %1252 = vmatprep.subr.mxu0 0.0
  %1253 = vmatpush1.msra.mxu0 0.0
  %1254 = vmatprep.subr.mxu0 0.0
  %1255 = vmatpush1.msra.mxu0 0.0
  %1256 = vmatprep.subr.mxu0 0.0
  %1257 = vmatpush1.msra.mxu0 0.0
  %1258 = vmatprep.subr.mxu0 0.0
  %1259 = vmatpush1.msra.mxu0 0.0
  %1260 = vmatprep.subr.mxu0 0.0
  %1261 = vmatpush1.msra.mxu0 %v1223
  %1262 = vmatprep.subr.mxu0 0.0
  %1263 = vmatpush1.msra.mxu0 %v1222
  %1264 = vmatprep.subr.mxu0 0.0
  %1265 = vmatpush2.msra.mxu0 0.0
  %1266 = vmatprep.subr.mxu0 0.0
  %1267 = vmatpush2.msra.mxu0 0.0
  %1268 = vmatprep.subr.mxu0 0.0
  %1269 = vmatpush2.msra.mxu0 0.0
  %1270 = vmatprep.subr.mxu0 0.0
  %1271 = vmatpush2.msra.mxu0 0.0
  %1272 = vmatprep.subr.mxu0 0.0
  %1273 = vmatpush2.msra.mxu0 0.0
  %1274 = vmatprep.subr.mxu0 0.0
  %1275 = vmatpush2.msra.mxu0 0.0
  %1276 = vmatprep.subr.mxu0 0.0
  %1277 = vmatpush2.msra.mxu0 0.0
  %1278 = vmatprep.subr.mxu0 0.0
  %1279 = vmatpush2.msra.mxu0 0.0
  %1280 = vmatprep.subr.mxu0 0.0
  %1281 = vmatpush2.msra.mxu0 0.0
  %1282 = vmatprep.subr.mxu0 0.0
  %1283 = vmatpush2.msra.mxu0 0.0
  %1284 = vmatprep.subr.mxu0 0.0
  %1285 = vmatpush2.msra.mxu0 0.0
  %1286 = vmatprep.subr.mxu0 0.0
  %1287 = vmatpush2.msra.mxu0 0.0
  %1288 = vmatprep.subr.mxu0 0.0
  %1289 = vmatpush2.msra.mxu0 0.0
  %1290 = vmatprep.subr.mxu0 0.0
  %1291 = vmatpush2.msra.mxu0 0.0
  %1292 = vmatprep.subr.mxu0 0.0
  %1293 = vmatpush2.msra.mxu0 0.0
  %1294 = vmatprep.subr.mxu0 0.0
  %1295 = vmatpush2.msra.mxu0 0.0
  %1296 = vmatprep.mubr.f32.mxu0 0.0
  %1297 = vmatmul.mubr.f32.gmra.mxu0 %v1230
  %v1298 = vpop.f32.mrf.mxu0
  %v1299 = vadd.f32 %v1227, %v1298
  %v1300 = vpop.f32.mrf.mxu0
  %1301 = vdwg.mxu0
  %1302 = vst [vmem:[%s2] sm:$0xff] %v1299
  // Predicated region
  $region10: #{policy_network_forward.1} parent=0 // pred_check
    _
  $region11: #{policy_network_forward.1} parent=0 // pred_check_branch
    %1304 = sbr.rel (0) target = $region13
  $region12: #{policy_network_forward.1} parent=0 // pred_region
    _
  $region13: #{policy_network_forward.1} parent=0 // pred_fallthru
    _
  // Predicated region
  $region14: #{policy_network_forward.1} parent=0 // pred_check
    _
  $region15: #{policy_network_forward.1} parent=0 // pred_check_branch
    %1306 = sbr.rel (0) target = $region17
  $region16: #{policy_network_forward.1} parent=0 // pred_region
    _
  $region17: #{policy_network_forward.1} parent=0 // pred_fallthru
    _

</llo_original>
